<compile_context>
chip_gen: v5e
topology: v5e:2x2
jax: 0.10.0
libtpu: 0.0.40
codegen_flags: <defaults>
</compile_context>

<pallas_src>
import functools

import jax
import jax.numpy as jnp
from jax import lax
from jax.experimental import pallas as pl
from jax.experimental.pallas import tpu as pltpu

_LANES = 128


def _ce_kernel(logits_ref, tgt_ref, out_ref, *, nb_classes, n_valid, tile_rows,
               needs_mask):
    """One grid step: a (C, TR, 128) logits tile + (TR, 128) target tile.

    Writes the per-lane partial loss sums (1, 128) for this tile.
    """
    j = pl.program_id(1)

    t = tgt_ref[...]  # (TR, 128) int32

    # Running max over class slabs (unrolled; full-lane VPU elementwise).
    m = logits_ref[0].astype(jnp.float32)  # (TR, 128)
    for c in range(1, nb_classes):
        m = jnp.maximum(m, logits_ref[c].astype(jnp.float32))

    # Exp-sum (EUP) + one-hot target gather, unrolled over classes.
    # Re-reading each class slab from VMEM is intentional: holding all C slabs
    # live would blow the 64-vreg budget and spill anyway.
    ssum = jnp.zeros_like(m)
    tgt_logit = jnp.zeros_like(m)
    for c in range(nb_classes):
        xc = logits_ref[c].astype(jnp.float32)
        ssum = ssum + jnp.exp(xc - m)
        tgt_logit = jnp.where(t == c, xc, tgt_logit)

    # Per-voxel NLL: logsumexp - logits[target]
    loss = (jnp.log(ssum) + m) - tgt_logit  # (TR, 128)

    if needs_mask:
        # Mask voxels beyond the true per-batch count (partial tiles / padding).
        row = lax.broadcasted_iota(jnp.int32, loss.shape, 0)
        col = lax.broadcasted_iota(jnp.int32, loss.shape, 1)
        flat = (j * tile_rows + row) * _LANES + col
        loss = jnp.where(flat < n_valid, loss, 0.0)

    # One cheap sublane reduce per ~1 MiB tile (XLU slot is otherwise idle).
    out_ref[...] = jnp.sum(loss, axis=0, keepdims=True)  # (1, 128)


@functools.partial(jax.jit, static_argnames=("nb_classes", "tile_rows"))
def ce_loss(output, target, nb_classes, tile_rows=512):
    """output: (N, C, D, H, W) float; target: (N, D, H, W) integer class ids."""
    n, c, d, h, w = output.shape
    assert c == nb_classes
    msp = d * h * w

    # Native layout: NCDHW -> (N, C, D*H*W) is a free reshape (no HBM copy).
    logits = output.reshape(n, c, msp)
    tgt = target.reshape(n, msp).astype(jnp.int32)

    # Lane-dense: split the spatial axis into rows of 128 lanes.
    msp_pad = ((msp + _LANES - 1) // _LANES) * _LANES
    if msp_pad != msp:
        # Only triggers when D*H*W is not a multiple of 128 (one small copy).
        logits = jnp.pad(logits, ((0, 0), (0, 0), (0, msp_pad - msp)))
        tgt = jnp.pad(tgt, ((0, 0), (0, msp_pad - msp)))
    r = msp_pad // _LANES
    logits = logits.reshape(n, c, r, _LANES)
    tgt = tgt.reshape(n, r, _LANES)

    # Rows per tile: multiple of 8 (sublane), or the full row count if small.
    tile_rows = max(8, (tile_rows // 8) * 8)
    tr = r if r <= tile_rows else tile_rows
    grid = (n, pl.cdiv(r, tr))

    # Only compile the in-kernel validity mask when there can be padded /
    # out-of-range voxels in a tile (static decision -> zero cost otherwise).
    needs_mask = (msp_pad != msp) or (r % tr != 0)

    kernel = functools.partial(
        _ce_kernel,
        nb_classes=nb_classes,
        n_valid=msp,
        tile_rows=tr,
        needs_mask=needs_mask,
    )

    partial_sums = pl.pallas_call(
        kernel,
        out_shape=jax.ShapeDtypeStruct((n, grid[1], 1, _LANES), jnp.float32),
        grid_spec=pltpu.PrefetchScalarGridSpec(
            num_scalar_prefetch=0,
            grid=grid,
            in_specs=[
                pl.BlockSpec(
                    (None, nb_classes, tr, _LANES), lambda b, j: (b, 0, j, 0)
                ),
                pl.BlockSpec((None, tr, _LANES), lambda b, j: (b, j, 0)),
            ],
            out_specs=pl.BlockSpec(
                (None, None, 1, _LANES), lambda b, j: (b, j, 0, 0)
            ),
        ),
        compiler_params=pltpu.CompilerParams(
            dimension_semantics=("parallel", "parallel"),
            vmem_limit_bytes=32 * 1024 * 1024,
        ),
    )(logits, tgt)

    total_rows = n * msp
    return jnp.sum(partial_sums) / jnp.float32(total_rows)


def _ce_reference(output, target, nb_classes):
    logits = jnp.transpose(output, (0, 2, 3, 4, 1)).reshape(-1, nb_classes)
    tgt = target.reshape(-1).astype(jnp.int32)
    logp = jax.nn.log_softmax(logits.astype(jnp.float32), axis=-1)
    nll = -jnp.take_along_axis(logp, tgt[:, None], axis=-1)[:, 0]
    return jnp.mean(nll)


if __name__ == "__main__":
    key = jax.random.PRNGKey(0)

    # Case 1: small 5D shapes with D*H*W a multiple of 128 (mask-free path).
    # batch=2, classes=4, D=4, H=8, W=8 -> 256 voxels per batch element.
    k1, k2, k3, k4 = jax.random.split(key, 4)
    N, C, D, H, W = 2, 4, 4, 8, 8
    output = jax.random.normal(k1, (N, C, D, H, W), dtype=jnp.float32)
    target = jax.random.randint(k2, (N, D, H, W), 0, C, dtype=jnp.int32)

    loss = jax.block_until_ready(ce_loss(output, target, nb_classes=C))
    ref = _ce_reference(output, target, C)
    assert jnp.allclose(loss, ref, rtol=1e-5, atol=1e-5), (loss, ref)

    # Case 2: odd spatial extent (D*H*W = 105) exercising the masked path.
    N2, C2, D2, H2, W2 = 2, 4, 3, 5, 7
    output2 = jax.random.normal(k3, (N2, C2, D2, H2, W2), dtype=jnp.float32)
    target2 = jax.random.randint(k4, (N2, D2, H2, W2), 0, C2, dtype=jnp.int32)

    loss2 = jax.block_until_ready(ce_loss(output2, target2, nb_classes=C2))
    ref2 = _ce_reference(output2, target2, C2)
    assert jnp.allclose(loss2, ref2, rtol=1e-5, atol=1e-5), (loss2, ref2)

    print("KERNEL_OK")
</pallas_src>

<mosaic_0001>
module attributes {stable_mosaic.version = 11 : i64} {
  func.func @_ce_kernel(%arg0: i32, %arg1: i32, %arg2: memref<1x4x2x128xf32, #tpu.memory_space<vmem>>, %arg3: memref<1x2x128xi32, #tpu.memory_space<vmem>>, %arg4: memref<1x1x1x128xf32, #tpu.memory_space<vmem>>) attributes {dimension_semantics = [#tpu.dimension_semantics<parallel>, #tpu.dimension_semantics<parallel>], iteration_bounds = array<i64: 2, 1>, scalar_prefetch = 0 : i64, scratch_operands = 0 : i64, tpu.core_type = #tpu.core_type<tc>, window_params = [{transform_indices = @transform_0, window_bounds = array<i64: 1, 4, 2, 128>}, {transform_indices = @transform_1, window_bounds = array<i64: 1, 2, 128>}, {transform_indices = @transform_2, window_bounds = array<i64: 1, 1, 1, 128>}]} {
    %c0 = arith.constant 0 : index
    %c0_0 = arith.constant 0 : index
    %c0_1 = arith.constant 0 : index
    %0 = vector.load %arg3[%c0, %c0_0, %c0_1] : memref<1x2x128xi32, #tpu.memory_space<vmem>>, vector<1x2x128xi32>
    %1 = vector.shape_cast %0 : vector<1x2x128xi32> to vector<2x128xi32>
    %c0_2 = arith.constant 0 : index
    %c0_3 = arith.constant 0 : index
    %c0_4 = arith.constant 0 : index
    %c0_5 = arith.constant 0 : index
    %2 = vector.load %arg2[%c0_2, %c0_3, %c0_4, %c0_5] : memref<1x4x2x128xf32, #tpu.memory_space<vmem>>, vector<1x1x2x128xf32>
    %3 = vector.shape_cast %2 : vector<1x1x2x128xf32> to vector<2x128xf32>
    %c0_6 = arith.constant 0 : index
    %c1 = arith.constant 1 : index
    %c0_7 = arith.constant 0 : index
    %c0_8 = arith.constant 0 : index
    %4 = vector.load %arg2[%c0_6, %c1, %c0_7, %c0_8] : memref<1x4x2x128xf32, #tpu.memory_space<vmem>>, vector<1x1x2x128xf32>
    %5 = vector.shape_cast %4 : vector<1x1x2x128xf32> to vector<2x128xf32>
    %6 = arith.maximumf %3, %5 : vector<2x128xf32>
    %c0_9 = arith.constant 0 : index
    %c2 = arith.constant 2 : index
    %c0_10 = arith.constant 0 : index
    %c0_11 = arith.constant 0 : index
    %7 = vector.load %arg2[%c0_9, %c2, %c0_10, %c0_11] : memref<1x4x2x128xf32, #tpu.memory_space<vmem>>, vector<1x1x2x128xf32>
    %8 = vector.shape_cast %7 : vector<1x1x2x128xf32> to vector<2x128xf32>
    %9 = arith.maximumf %6, %8 : vector<2x128xf32>
    %c0_12 = arith.constant 0 : index
    %c3 = arith.constant 3 : index
    %c0_13 = arith.constant 0 : index
    %c0_14 = arith.constant 0 : index
    %10 = vector.load %arg2[%c0_12, %c3, %c0_13, %c0_14] : memref<1x4x2x128xf32, #tpu.memory_space<vmem>>, vector<1x1x2x128xf32>
    %11 = vector.shape_cast %10 : vector<1x1x2x128xf32> to vector<2x128xf32>
    %12 = arith.maximumf %9, %11 : vector<2x128xf32>
    %cst = arith.constant 0.000000e+00 : f32
    %13 = vector.broadcast %cst : f32 to vector<2x128xf32>
    %cst_15 = arith.constant 0.000000e+00 : f32
    %14 = vector.broadcast %cst_15 : f32 to vector<2x128xf32>
    %c0_16 = arith.constant 0 : index
    %c0_17 = arith.constant 0 : index
    %c0_18 = arith.constant 0 : index
    %c0_19 = arith.constant 0 : index
    %15 = vector.load %arg2[%c0_16, %c0_17, %c0_18, %c0_19] : memref<1x4x2x128xf32, #tpu.memory_space<vmem>>, vector<1x1x2x128xf32>
    %16 = vector.shape_cast %15 : vector<1x1x2x128xf32> to vector<2x128xf32>
    %17 = arith.subf %16, %12 : vector<2x128xf32>
    %18 = math.exp %17 : vector<2x128xf32>
    %19 = arith.addf %13, %18 : vector<2x128xf32>
    %c0_i32 = arith.constant 0 : i32
    %20 = vector.broadcast %c0_i32 : i32 to vector<2x128xi32>
    %21 = arith.cmpi eq, %1, %20 : vector<2x128xi32>
    %22 = arith.select %21, %16, %14 : vector<2x128xi1>, vector<2x128xf32>
    %c0_20 = arith.constant 0 : index
    %c1_21 = arith.constant 1 : index
    %c0_22 = arith.constant 0 : index
    %c0_23 = arith.constant 0 : index
    %23 = vector.load %arg2[%c0_20, %c1_21, %c0_22, %c0_23] : memref<1x4x2x128xf32, #tpu.memory_space<vmem>>, vector<1x1x2x128xf32>
    %24 = vector.shape_cast %23 : vector<1x1x2x128xf32> to vector<2x128xf32>
    %25 = arith.subf %24, %12 : vector<2x128xf32>
    %26 = math.exp %25 : vector<2x128xf32>
    %27 = arith.addf %19, %26 : vector<2x128xf32>
    %c1_i32 = arith.constant 1 : i32
    %28 = vector.broadcast %c1_i32 : i32 to vector<2x128xi32>
    %29 = arith.cmpi eq, %1, %28 : vector<2x128xi32>
    %30 = arith.select %29, %24, %22 : vector<2x128xi1>, vector<2x128xf32>
    %c0_24 = arith.constant 0 : index
    %c2_25 = arith.constant 2 : index
    %c0_26 = arith.constant 0 : index
    %c0_27 = arith.constant 0 : index
    %31 = vector.load %arg2[%c0_24, %c2_25, %c0_26, %c0_27] : memref<1x4x2x128xf32, #tpu.memory_space<vmem>>, vector<1x1x2x128xf32>
    %32 = vector.shape_cast %31 : vector<1x1x2x128xf32> to vector<2x128xf32>
    %33 = arith.subf %32, %12 : vector<2x128xf32>
    %34 = math.exp %33 : vector<2x128xf32>
    %35 = arith.addf %27, %34 : vector<2x128xf32>
    %c2_i32 = arith.constant 2 : i32
    %36 = vector.broadcast %c2_i32 : i32 to vector<2x128xi32>
    %37 = arith.cmpi eq, %1, %36 : vector<2x128xi32>
    %38 = arith.select %37, %32, %30 : vector<2x128xi1>, vector<2x128xf32>
    %c0_28 = arith.constant 0 : index
    %c3_29 = arith.constant 3 : index
    %c0_30 = arith.constant 0 : index
    %c0_31 = arith.constant 0 : index
    %39 = vector.load %arg2[%c0_28, %c3_29, %c0_30, %c0_31] : memref<1x4x2x128xf32, #tpu.memory_space<vmem>>, vector<1x1x2x128xf32>
    %40 = vector.shape_cast %39 : vector<1x1x2x128xf32> to vector<2x128xf32>
    %41 = arith.subf %40, %12 : vector<2x128xf32>
    %42 = math.exp %41 : vector<2x128xf32>
    %43 = arith.addf %35, %42 : vector<2x128xf32>
    %c3_i32 = arith.constant 3 : i32
    %44 = vector.broadcast %c3_i32 : i32 to vector<2x128xi32>
    %45 = arith.cmpi eq, %1, %44 : vector<2x128xi32>
    %46 = arith.select %45, %40, %38 : vector<2x128xi1>, vector<2x128xf32>
    %47 = math.log %43 : vector<2x128xf32>
    %48 = arith.addf %47, %12 : vector<2x128xf32>
    %49 = arith.subf %48, %46 : vector<2x128xf32>
    %cst_32 = arith.constant dense<0.000000e+00> : vector<128xf32>
    %50 = vector.multi_reduction <add>, %49, %cst_32 [0] : vector<2x128xf32> to vector<128xf32>
    %51 = vector.shape_cast %50 : vector<128xf32> to vector<1x128xf32>
    %c0_33 = arith.constant 0 : index
    %c0_34 = arith.constant 0 : index
    %c0_35 = arith.constant 0 : index
    %c0_36 = arith.constant 0 : index
    %52 = vector.load %arg4[%c0_33, %c0_34, %c0_35, %c0_36] : memref<1x1x1x128xf32, #tpu.memory_space<vmem>>, vector<1x1x1x128xf32>
    %53 = vector.shape_cast %52 : vector<1x1x1x128xf32> to vector<1x128xf32>
    %54 = vector.shape_cast %51 : vector<1x128xf32> to vector<1x1x1x128xf32>
    tpu.vector_store %arg4[%c0_33, %c0_34, %c0_35, %c0_36], %54 {strides = array<i32>} : memref<1x1x1x128xf32, #tpu.memory_space<vmem>>, vector<1x1x1x128xf32>,
    return
  }
  func.func @transform_0(%arg0: i32, %arg1: i32) -> (i32, i32, i32, i32) {
    %c0_i32 = arith.constant 0 : i32
    %c0_i32_0 = arith.constant 0 : i32
    %c0_i32_1 = arith.constant 0 : i32
    return %arg0, %c0_i32, %arg1, %c0_i32_0 : i32, i32, i32, i32
  }
  func.func @transform_1(%arg0: i32, %arg1: i32) -> (i32, i32, i32) {
    %c0_i32 = arith.constant 0 : i32
    %c0_i32_0 = arith.constant 0 : i32
    return %arg0, %arg1, %c0_i32 : i32, i32, i32
  }
  func.func @transform_2(%arg0: i32, %arg1: i32) -> (i32, i32, i32, i32) {
    %c0_i32 = arith.constant 0 : i32
    %c0_i32_0 = arith.constant 0 : i32
    %c0_i32_1 = arith.constant 0 : i32
    return %arg0, %arg1, %c0_i32, %c0_i32_0 : i32, i32, i32, i32
  }
}

</mosaic_0001>

<llo_original>
// kernel: ce_loss.1
$region0: #{ce_loss.1}
  #allocation0 [shape = 'u32[]', space=smem, size = 0x4, offset = 0x4, fixed_abs, tag = 'smem constant byte address 0x4 - core index']
  #allocation1 [shape = 'u32[72,128]{1,0:T(1,128)}', space=vmem, size = 0x9000, scoped, tag = 'internal scratch']
  %s0 = inlined_call_operand.vmem [shape: f32[2,4,2,128], index: 0, kind: input, shape index: {}]
  %s1 = inlined_call_operand.vmem [shape: s32[2,2,128], index: 1, kind: input, shape index: {}]
  %s2 = inlined_call_operand.vmem [shape: f32[2,1,1,128], index: 2, kind: output, shape index: {}]
  %s3 = sld [smem:[#allocation0]]
  $region41: #{ce_loss.1} parent=0
    _
  %s5 = ssub.s32 1, %s3
  %s6 = scalar_select 0, %s5, %s3
  loop: start=0, step=1, limit=4
  $region2: #{ce_loss.1} parent=0 // loop_pre_header
    _
  $region3: #{ce_loss.1} parent=0 // loop_header
    %s8 = sphi 0, %s12
    %p9 = scmp.ge.s32.totalorder %s8, 4
    %s15 = sphi 0, %s27
    %s16 = sphi 0, %s23
    %s17 = sphi 0, %s15
    %s18 = sphi 0, %s16
    %s19 = sphi 0, %s17
    %s20 = sphi 0, %s18
    %s32 = sphi 0, %s34
    %s35 = sphi 0, %s32
    %s36 = sphi 0, %s35
    %s52 = sphi 0, %s36
    %s60 = sphi 0, %s62
    %s63 = sphi 0, %s60
    %s64 = sphi 0, %s63
    %s80 = sphi 0, %s64
    %s88 = sphi 0, %s90
    %s91 = sphi 0, %s88
    %s92 = sphi 0, %s91
    %s108 = sphi 0, %s92
  $region4: #{ce_loss.1} parent=0 // loop_header_branch
    %11 = sbr.rel (%p9) target = $region8
  $region5: #{ce_loss.1} parent=0 // loop_body
    %s13 = ssub.s32 %s8, 1
    %s14 = ssub.s32 %s8, 2
    %s21 = sadd.s32 1, %s16
    %p22 = scmp.ge.s32.totalorder %s21, 1
    %s23 = scalar_select %p22, 0, %s21
    %s24 = sadd.s32 1, %s15
    %s25 = scalar_select %p22, %s24, %s15
    %p26 = scmp.ge.s32.totalorder %s25, 2
    %s27 = scalar_select %p26, 0, %s25
    %s28 = ssub.s32 %s15, %s27
    %s29 = ssub.s32 %s16, %s23
    %s30 = sor.u32 %s28, %s29
    %p31 = scmp.eq.s32.totalorder %s30, 0
    %s33 = sadd.s32 %s32, 1
    %s34 = scalar_select %p31, %s32, %s33
    %p37 = pneg %p31
    %p38 = scmp.eq.s32.totalorder %s8, 1
    %p39 = por %p37, %p38
    %p40 = scmp.ne.s32.totalorder %s32, %s35
    %p41 = scmp.eq.s32.totalorder %s8, 0
    %p42 = por %p40, %p41
    %p43 = scmp.ne.s32.totalorder %s32, %s35
    %p44 = scmp.eq.s32.totalorder %s13, 1
    %p45 = por %p43, %p44
    %p46 = scmp.ne.s32.totalorder %s35, %s36
    %p47 = scmp.eq.s32.totalorder %s13, 0
    %p48 = por %p46, %p47
    %p49 = scmp.ne.s32.totalorder %s35, %s36
    %p50 = scmp.eq.s32.totalorder %s14, 1
    %p51 = por %p49, %p50
    %p53 = scmp.ne.s32.totalorder %s36, %s52
    %p54 = scmp.eq.s32.totalorder %s14, 0
    %p55 = por %p53, %p54
    %s56 = ssub.s32 %s15, %s27
    %s57 = ssub.s32 %s16, %s23
    %s58 = sor.u32 %s56, %s57
    %p59 = scmp.eq.s32.totalorder %s58, 0
    %s61 = sadd.s32 %s60, 1
    %s62 = scalar_select %p59, %s60, %s61
    %p65 = pneg %p59
    %p66 = scmp.eq.s32.totalorder %s8, 1
    %p67 = por %p65, %p66
    %p68 = scmp.ne.s32.totalorder %s60, %s63
    %p69 = scmp.eq.s32.totalorder %s8, 0
    %p70 = por %p68, %p69
    %p71 = scmp.ne.s32.totalorder %s60, %s63
    %p72 = scmp.eq.s32.totalorder %s13, 1
    %p73 = por %p71, %p72
    %p74 = scmp.ne.s32.totalorder %s63, %s64
    %p75 = scmp.eq.s32.totalorder %s13, 0
    %p76 = por %p74, %p75
    %p77 = scmp.ne.s32.totalorder %s63, %s64
    %p78 = scmp.eq.s32.totalorder %s14, 1
    %p79 = por %p77, %p78
    %p81 = scmp.ne.s32.totalorder %s64, %s80
    %p82 = scmp.eq.s32.totalorder %s14, 0
    %p83 = por %p81, %p82
    %s84 = ssub.s32 %s15, %s27
    %s85 = ssub.s32 %s16, %s23
    %s86 = sor.u32 %s84, %s85
    %p87 = scmp.eq.s32.totalorder %s86, 0
    %s89 = sadd.s32 %s88, 1
    %s90 = scalar_select %p87, %s88, %s89
    %p93 = pneg %p87
    %p94 = scmp.eq.s32.totalorder %s8, 1
    %p95 = por %p93, %p94
    %p96 = scmp.ne.s32.totalorder %s88, %s91
    %p97 = scmp.eq.s32.totalorder %s8, 0
    %p98 = por %p96, %p97
    %p99 = scmp.ne.s32.totalorder %s88, %s91
    %p100 = scmp.eq.s32.totalorder %s13, 1
    %p101 = por %p99, %p100
    %p102 = scmp.ne.s32.totalorder %s91, %s92
    %p103 = scmp.eq.s32.totalorder %s13, 0
    %p104 = por %p102, %p103
    %p105 = scmp.ne.s32.totalorder %s91, %s92
    %p106 = scmp.eq.s32.totalorder %s14, 1
    %p107 = por %p105, %p106
    %p109 = scmp.ne.s32.totalorder %s92, %s108
    %p110 = scmp.eq.s32.totalorder %s14, 0
    %p111 = por %p109, %p110
    %p112 = scmp.le.s32.totalorder 1, %s8
    %p113 = scmp.lt.s32.totalorder %s8, 3
    %p114 = pnand %p112, %p113
    %p115 = pneg %p114
    // Predicated region
    $region9: #{ce_loss.1} parent=5 // pred_check
      _
    $region10: #{ce_loss.1} parent=5 // pred_check_branch
      %117 = sbr.rel (%p114) target = $region12
    $region11: #{ce_loss.1} parent=5 // pred_region
      %s118 = ssub.s32 %s8, 1
    $region12: #{ce_loss.1} parent=5 // pred_fallthru
      _
    %p119 = scmp.lt.s32.totalorder %s8, 2
    // Predicated region
    $region13: #{ce_loss.1} parent=5 // pred_check
      %p120 = pneg %p119
    $region14: #{ce_loss.1} parent=5 // pred_check_branch
      %122 = sbr.rel (%p120) target = $region16
    $region15: #{ce_loss.1} parent=5 // pred_region
      // Predicated region
      $region17: #{ce_loss.1} parent=15 // pred_check
        %p123 = pneg %p42
      $region18: #{ce_loss.1} parent=15 // pred_check_branch
        %125 = sbr.rel (%p123) target = $region20
      $region19: #{ce_loss.1} parent=15 // pred_region
        %p126 = scmp.lt.s32.totalorder %s15, 1
        %s127 = scalar_select %p126, %s15, 1
        %p128 = scmp.lt.s32.totalorder %s16, 0
        %s129 = scalar_select %p128, %s16, 0
        %s130 = smul.addr %s127, 4
        %s131 = sadd.s32 %s129, %s130
        %s132 = smul.addr %s131, 2
        %s133 = scalar_lea.vmem %s0, %s132
      $region20: #{ce_loss.1} parent=15 // pred_fallthru
        _
      // Predicated region
      $region21: #{ce_loss.1} parent=15 // pred_check
        %p134 = pneg %p70
      $region22: #{ce_loss.1} parent=15 // pred_check_branch
        %136 = sbr.rel (%p134) target = $region24
      $region23: #{ce_loss.1} parent=15 // pred_region
        %p137 = scmp.lt.s32.totalorder %s15, 1
        %s138 = scalar_select %p137, %s15, 1
        %p139 = scmp.lt.s32.totalorder %s16, 0
        %s140 = scalar_select %p139, %s16, 0
        %s141 = sadd.s32 %s140, %s138
        %s142 = smul.addr %s141, 2
        %s143 = scalar_lea.vmem %s1, %s142
      $region24: #{ce_loss.1} parent=15 // pred_fallthru
        _
    $region16: #{ce_loss.1} parent=5 // pred_fallthru
      _
    %p144 = scmp.le.s32.totalorder 1, %s8
    %p145 = scmp.lt.s32.totalorder %s8, 3
    %p146 = pnand %p144, %p145
    %p147 = pneg %p146
    // Predicated region
    $region25: #{ce_loss.1} parent=5 // pred_check
      _
    $region26: #{ce_loss.1} parent=5 // pred_check_branch
      %149 = sbr.rel (%p146) target = $region28
    $region27: #{ce_loss.1} parent=5 // pred_region
      %s150 = ssub.s32 %s8, 1
      %p151 = scmp.lt.s32.totalorder %s17, 1
      %s152 = scalar_select %p151, %s17, 1
      %p153 = scmp.lt.s32.totalorder %s18, 0
      %s154 = scalar_select %p153, %s18, 0
      %s155 = smul.addr %s152, 4
      %s156 = sadd.s32 %s154, %s155
      %s157 = smul.addr %s156, 2
      %s158 = scalar_lea.vmem %s0, %s157
      %p159 = pneg %p48
      %p160 = pneg %p45
      %p161 = scmp.lt.s32.totalorder %s17, 1
      %s162 = scalar_select %p161, %s17, 1
      %p163 = scmp.lt.s32.totalorder %s18, 0
      %s164 = scalar_select %p163, %s18, 0
      %s165 = sadd.s32 %s164, %s162
      %s166 = smul.addr %s165, 2
      %s167 = scalar_lea.vmem %s1, %s166
      %p168 = pneg %p76
      %p169 = pneg %p73
      %p170 = pneg %p104
      %p171 = pneg %p101
      %p172 = scmp.lt.s32.totalorder %s17, 1
      %s173 = scalar_select %p172, %s17, 1
      %p174 = scmp.lt.s32.totalorder %s18, 0
      %s175 = scalar_select %p174, %s18, 0
      %s176 = sadd.s32 %s175, %s173
      %s177 = scalar_lea.vmem %s2, %s176
      %p178 = scmp.lt.s32.totalorder %s17, 1
      %s179 = scalar_select %p178, %s17, 1
      %p180 = scmp.lt.s32.totalorder %s18, 0
      %s181 = scalar_select %p180, %s18, 0
      %s182 = smul.addr %s179, 4
      %s183 = sadd.s32 %s181, %s182
      %s184 = smul.addr %s183, 2
      %s185 = scalar_lea.vmem %s0, %s184
      %p186 = scmp.lt.s32.totalorder %s17, 1
      %s187 = scalar_select %p186, %s17, 1
      %p188 = scmp.lt.s32.totalorder %s18, 0
      %s189 = scalar_select %p188, %s18, 0
      %s190 = sadd.s32 %s189, %s187
      %s191 = smul.addr %s190, 2
      %s192 = scalar_lea.vmem %s1, %s191
      %p193 = scmp.lt.s32.totalorder %s17, 1
      %s194 = scalar_select %p193, %s17, 1
      %p195 = scmp.lt.s32.totalorder %s18, 0
      %s196 = scalar_select %p195, %s18, 0
      %s197 = sadd.s32 %s196, %s194
      %s198 = scalar_lea.vmem %s2, %s197
      %v199 = vld [vmem:[%s192] sm:$0x3]
      %v200 = vld [vmem:[%s185] sm:$0x3]
      %s201 = scalar_lea.vmem %s185, 2
      %v202 = vld [vmem:[%s201] sm:$0x3]
      %v203 = vmax.f32 %v200, %v202
      %s204 = scalar_lea.vmem %s185, 4
      %v205 = vld [vmem:[%s204] sm:$0x3]
      %v206 = vmax.f32 %v203, %v205
      %s207 = scalar_lea.vmem %s185, 6
      %v208 = vld [vmem:[%s207] sm:$0x3]
      %v209 = vmax.f32 %v206, %v208
      %v210 = vsub.f32 %v200, %v209
      %v211 = vmul.f32 %v210, 1.442695
      %v212 = vpow.pop %v211
      %v213 = vadd.f32 %v212, 0.0
      %vm214 = vcmp.eq.s32.totalorder %v199, 0
      %v215 = vsel %vm214, %v200, 0.0
      %v216 = vsub.f32 %v202, %v209
      %v217 = vmul.f32 %v216, 1.442695
      %v218 = vpow.pop %v217
      %v219 = vadd.f32 %v213, %v218
      %vm220 = vcmp.eq.s32.totalorder %v199, 1
      %v221 = vsel %vm220, %v202, %v215
      %v222 = vsub.f32 %v205, %v209
      %v223 = vmul.f32 %v222, 1.442695
      %v224 = vpow.pop %v223
      %v225 = vadd.f32 %v219, %v224
      %vm226 = vcmp.eq.s32.totalorder %v199, 2
      %v227 = vsel %vm226, %v205, %v221
      %v228 = vsub.f32 %v208, %v209
      %v229 = vmul.f32 %v228, 1.442695
      %v230 = vpow.pop %v229
      %v231 = vadd.f32 %v225, %v230
      %vm232 = vcmp.eq.s32.totalorder %v199, 3
      %v233 = vsel %vm232, %v208, %v227
      %v234 = vlog2.pop %v231
      %v235 = vmul.f32 %v234, 0.6931472
      %v236 = vadd.f32 %v235, %v209
      %v237 = vsub.f32 %v236, %v233
      %vm238 = vcmask 1041408
      %v239 = vsel %vm238, %v237, 0.0
      %v240 = vrot.slane %v239, 4
      %v241 = vadd.f32 %v239, %v240
      %v242 = vrot.slane %v241, 2
      %v243 = vadd.f32 %v241, %v242
      %v244 = vrot.slane %v243, 1
      %v245 = vadd.f32 %v243, %v244
      %246 = vst [vmem:[%s198] sm:$0x1] %v245
      %p247 = scmp.lt.s32.totalorder %s17, 1
      %s248 = scalar_select %p247, %s17, 1
      %p249 = scmp.lt.s32.totalorder %s18, 0
      %s250 = scalar_select %p249, %s18, 0
      %s251 = sadd.s32 %s250, %s248
      %s252 = scalar_lea.vmem %s2, %s251
      // Predicated region
      $region29: #{ce_loss.1} parent=27 // pred_check
        %p253 = pneg %p101
      $region30: #{ce_loss.1} parent=27 // pred_check_branch
        %255 = sbr.rel (%p253) target = $region32
      $region31: #{ce_loss.1} parent=27 // pred_region
        _
      $region32: #{ce_loss.1} parent=27 // pred_fallthru
        _
    $region28: #{ce_loss.1} parent=5 // pred_fallthru
      _
    %p256 = scmp.le.s32.totalorder 2, %s8
    // Predicated region
    $region33: #{ce_loss.1} parent=5 // pred_check
      %p257 = pneg %p256
    $region34: #{ce_loss.1} parent=5 // pred_check_branch
      %259 = sbr.rel (%p257) target = $region36
    $region35: #{ce_loss.1} parent=5 // pred_region
      %s260 = ssub.s32 %s8, 2
      // Predicated region
      $region37: #{ce_loss.1} parent=35 // pred_check
        %p261 = pneg %p107
      $region38: #{ce_loss.1} parent=35 // pred_check_branch
        %263 = sbr.rel (%p261) target = $region40
      $region39: #{ce_loss.1} parent=35 // pred_region
        %p264 = scmp.lt.s32.totalorder %s19, 1
        %s265 = scalar_select %p264, %s19, 1
        %p266 = scmp.lt.s32.totalorder %s20, 0
        %s267 = scalar_select %p266, %s20, 0
        %s268 = sadd.s32 %s267, %s265
        %s269 = scalar_lea.vmem %s2, %s268
      $region40: #{ce_loss.1} parent=35 // pred_fallthru
        _
    $region36: #{ce_loss.1} parent=5 // pred_fallthru
      _
  $region6: #{ce_loss.1} parent=0 // loop_footer
    %s12 = sadd.s32 1, %s8
  $region7: #{ce_loss.1} parent=0 // loop_footer_branch
    %7 = sbr.rel target = $region3
  $region8: #{ce_loss.1} parent=0 // loop_exit
    _

</llo_original>
